<compile_context>
chip_gen: v5e
topology: v5e:2x2
jax: 0.10.0
libtpu: 0.0.40
codegen_flags: <defaults>
</compile_context>

<pallas_src>
import functools

import jax
import jax.numpy as jnp
from jax.experimental import pallas as pl
from jax.experimental.pallas import tpu as pltpu


def _round_up(n, m):
    return (n + m - 1) // m * m


def _cdiv(a, b):
    return (a + b - 1) // b


def _vmem_budget_bytes():
    """Per-core VMEM budget with ~15% headroom (128 MiB v5e/v6e, 64 MiB v7x)."""
    cap = 64 * 2**20
    try:
        info = pltpu.get_tpu_info()
        cap = int(getattr(info, "vmem_capacity_bytes", cap)) or cap
    except Exception:
        pass
    return int(cap * 0.85)


def _batch_tiles(B, block_b):
    """Balanced batch tiling; >=2 grid steps when B >= 16 (megacore sharding)."""
    min_steps = 2 if B >= 16 else 1
    num_tiles = max(_cdiv(B, block_b), min_steps)
    bb = max(8, _round_up(_cdiv(B, num_tiles), 8))
    Bp = num_tiles * bb
    return bb, Bp, num_tiles


def _pick_feature_tile(dim):
    for c in (512, 256, 128):
        if dim % c == 0:
            return c
    return dim


# ----------------------------------------------------------------------------
# Fused path: all four weights resident in VMEM, single-buffered.
# ----------------------------------------------------------------------------
def ff_fused_kernel(x_ref, w1_ref, b1_ref, w2_ref, b2_ref, w3_ref, b3_ref,
                    ws_ref, bs_ref, o_ref, *, compute_dtype):
    cd = compute_dtype
    x = x_ref[...].astype(cd)

    def lin(h, w_ref, b_ref):
        return (jnp.dot(h, w_ref[...].astype(cd),
                        preferred_element_type=jnp.float32)
                + b_ref[...].astype(jnp.float32))

    h = jnp.maximum(lin(x, w1_ref, b1_ref), 0.0)
    h = jnp.maximum(lin(h.astype(cd), w2_ref, b2_ref), 0.0)
    h = jnp.maximum(lin(h.astype(cd), w3_ref, b3_ref), 0.0)
    sc = lin(x, ws_ref, bs_ref)                       # linear_shortcut
    o_ref[...] = (h + sc).astype(o_ref.dtype)


# ----------------------------------------------------------------------------
# Tiled fallback: generic (B, N, K)-tiled linear (+bias, optional ReLU,
# optional residual add) with f32 accumulator scratch. Used per layer when the
# resident weights would not fit in VMEM (large D, especially v7x).
# ----------------------------------------------------------------------------
def _linear_tiled_kernel(*refs, relu, compute_dtype, has_residual):
    if has_residual:
        x_ref, w_ref, b_ref, r_ref, o_ref, acc_ref = refs
    else:
        x_ref, w_ref, b_ref, o_ref, acc_ref = refs
    k = pl.program_id(2)

    @pl.when(k == 0)
    def _():
        acc_ref[...] = jnp.zeros_like(acc_ref)

    acc_ref[...] += jnp.dot(x_ref[...].astype(compute_dtype),
                            w_ref[...].astype(compute_dtype),
                            preferred_element_type=jnp.float32)

    @pl.when(k == pl.num_programs(2) - 1)
    def _():
        y = acc_ref[...] + b_ref[...].astype(jnp.float32)
        if relu:
            y = jnp.maximum(y, 0.0)
        if has_residual:
            y = y + r_ref[...].astype(jnp.float32)
        o_ref[...] = y.astype(o_ref.dtype)


def _linear_tiled(x, w, b, *, residual=None, relu, compute_dtype, bm, budget):
    Bp, K = x.shape
    _, N = w.shape
    bn = _pick_feature_tile(N)
    bk = _pick_feature_tile(K)
    grid = (Bp // bm, N // bn, K // bk)

    in_specs = [
        pl.BlockSpec((bm, bk), lambda i, j, k: (i, k)),
        pl.BlockSpec((bk, bn), lambda i, j, k: (k, j)),
        pl.BlockSpec((1, bn), lambda i, j, k: (0, j)),
    ]
    args = [x, w, b]
    if residual is not None:
        in_specs.append(pl.BlockSpec((bm, bn), lambda i, j, k: (i, j)))
        args.append(residual)

    w_is = jnp.dtype(w.dtype).itemsize
    x_is = jnp.dtype(x.dtype).itemsize
    cost = pl.CostEstimate(
        flops=2 * Bp * N * K,
        transcendentals=0,
        bytes_accessed=K * N * w_is + Bp * (K + N) * x_is,
    )

    kernel = functools.partial(_linear_tiled_kernel, relu=relu,
                               compute_dtype=compute_dtype,
                               has_residual=residual is not None)
    return pl.pallas_call(
        kernel,
        out_shape=jax.ShapeDtypeStruct((Bp, N), x.dtype),
        grid_spec=pltpu.PrefetchScalarGridSpec(
            num_scalar_prefetch=0,
            grid=grid,
            in_specs=in_specs,
            out_specs=pl.BlockSpec((bm, bn), lambda i, j, k: (i, j)),
            scratch_shapes=[pltpu.VMEM((bm, bn), jnp.float32)],
        ),
        compiler_params=pltpu.CompilerParams(
            dimension_semantics=("parallel", "parallel", "arbitrary"),
            vmem_limit_bytes=budget),
        cost_estimate=cost,
    )(*args)


# ----------------------------------------------------------------------------
# Public wrapper.
# ----------------------------------------------------------------------------
@functools.partial(jax.jit,
                   static_argnames=("block_b", "compute_dtype", "force_tiled"))
def ff_forward(x, padded_params, block_b=256, compute_dtype=None,
               force_tiled=False):
    """x: (B, D). padded_params: output of prepare_params (weights (Dp, Dp),
    biases (1, Dp), Dp a multiple of 128, padding already applied once)."""
    B, D = x.shape
    w1 = padded_params["w1"]
    Dp = w1.shape[0]
    assert w1.shape == (Dp, Dp) and Dp % 128 == 0 and Dp >= D

    cd = jnp.dtype(compute_dtype) if compute_dtype is not None else jnp.dtype(x.dtype)
    w_dt = jnp.dtype(w1.dtype)
    w_is, x_is, cd_is = w_dt.itemsize, jnp.dtype(x.dtype).itemsize, cd.itemsize

    bb, Bp, _ = _batch_tiles(B, block_b)
    budget = _vmem_budget_bytes()

    # VMEM footprint of the fused (resident-weight) path:
    #   4 single-buffered (Dp,Dp) weights (+ one cast temp if dtypes differ),
    #   4 sublane-padded biases (~32*Dp bytes each for f32/bf16),
    #   double-buffered x/out batch tiles, and the live f32/compute intermediates.
    cast_tmp = Dp * Dp * cd_is if cd != w_dt else 0
    weights_resident = 4 * Dp * Dp * w_is + cast_tmp
    needed = (weights_resident
              + 4 * 32 * Dp
              + 2 * bb * Dp * 2 * x_is
              + bb * Dp * (2 * 4 + 2 * cd_is))

    use_tiled = bool(force_tiled) or needed > budget or weights_resident > budget // 2

    # Pad x (weights/biases were padded once in prepare_params).
    xp = x if (Bp == B and Dp == D) else jnp.pad(x, ((0, Bp - B), (0, Dp - D)))

    if use_tiled:
        p = padded_params
        kw = dict(compute_dtype=cd, bm=bb, budget=budget)
        h = _linear_tiled(xp, p["w1"], p["b1"], relu=True, **kw)
        h = _linear_tiled(h, p["w2"], p["b2"], relu=True, **kw)
        h = _linear_tiled(h, p["w3"], p["b3"], relu=True, **kw)
        out = _linear_tiled(xp, p["ws"], p["bs"], residual=h, relu=False, **kw)
        return out[:B, :D]

    vmem_limit = int(min(budget, max(int(needed * 1.15), 32 * 2**20)))

    # Grid-invariant weights/biases: resident in VMEM, single-buffered.
    def resident(shape):
        return pl.BlockSpec(shape, lambda i: (0, 0), pipeline_mode=pl.Buffered(1))

    cost = pl.CostEstimate(
        flops=8 * B * D * D,                      # 4 matmuls, 2 flops/MAC, true B/D
        transcendentals=0,
        bytes_accessed=4 * D * D * w_is + 4 * D * w_is + 2 * B * D * x_is,
    )

    out = pl.pallas_call(
        functools.partial(ff_fused_kernel, compute_dtype=cd),
        out_shape=jax.ShapeDtypeStruct((Bp, Dp), x.dtype),
        grid_spec=pltpu.PrefetchScalarGridSpec(
            num_scalar_prefetch=0,
            grid=(Bp // bb,),
            in_specs=[
                pl.BlockSpec((bb, Dp), lambda i: (i, 0)),   # x (batch-tiled)
                resident((Dp, Dp)), resident((1, Dp)),      # w1, b1
                resident((Dp, Dp)), resident((1, Dp)),      # w2, b2
                resident((Dp, Dp)), resident((1, Dp)),      # w3, b3
                resident((Dp, Dp)), resident((1, Dp)),      # ws, bs
            ],
            out_specs=pl.BlockSpec((bb, Dp), lambda i: (i, 0)),
        ),
        compiler_params=pltpu.CompilerParams(
            dimension_semantics=("parallel",),
            vmem_limit_bytes=vmem_limit),
        cost_estimate=cost,
    )(xp, padded_params["w1"], padded_params["b1"],
      padded_params["w2"], padded_params["b2"],
      padded_params["w3"], padded_params["b3"],
      padded_params["ws"], padded_params["bs"])

    return out[:B, :D]


def init_params(key, input_dim, dtype=jnp.float32):
    """PyTorch-Linear-style init (uniform +-1/sqrt(in)); weights stored (in, out)."""
    bound = 1.0 / jnp.sqrt(jnp.asarray(input_dim, jnp.float32))
    keys = jax.random.split(key, 8)

    def u(k, shape):
        return jax.random.uniform(k, shape, dtype, minval=-bound, maxval=bound)

    return {
        "w1": u(keys[0], (input_dim, input_dim)), "b1": u(keys[1], (1, input_dim)),
        "w2": u(keys[2], (input_dim, input_dim)), "b2": u(keys[3], (1, input_dim)),
        "w3": u(keys[4], (input_dim, input_dim)), "b3": u(keys[5], (1, input_dim)),
        "ws": u(keys[6], (input_dim, input_dim)), "bs": u(keys[7], (1, input_dim)),
    }


def prepare_params(params):
    """Pad weights/biases to lane-dense (multiple-of-128) feature dims ONCE,
    outside the per-call path (removes per-forward weight re-write in HBM)."""
    D = params["w1"].shape[0]
    Dp = _round_up(D, 128)
    if Dp == D:
        return dict(params)
    pw = lambda w: jnp.pad(w, ((0, Dp - D), (0, Dp - D)))
    pb = lambda b: jnp.pad(b, ((0, 0), (0, Dp - D)))
    return {
        "w1": pw(params["w1"]), "b1": pb(params["b1"]),
        "w2": pw(params["w2"]), "b2": pb(params["b2"]),
        "w3": pw(params["w3"]), "b3": pb(params["b3"]),
        "ws": pw(params["ws"]), "bs": pb(params["bs"]),
    }


def ff_reference(x, p):
    h = jnp.maximum(x @ p["w1"] + p["b1"], 0.0)
    h = jnp.maximum(h @ p["w2"] + p["b2"], 0.0)
    h = jnp.maximum(h @ p["w3"] + p["b3"], 0.0)
    return h + (x @ p["ws"] + p["bs"])


if __name__ == "__main__":
    key = jax.random.PRNGKey(0)
    k_x, k_p = jax.random.split(key)

    batch, input_dim = 8, 32
    x = jax.random.normal(k_x, (batch, input_dim), jnp.float32)
    params = init_params(k_p, input_dim, dtype=jnp.float32)
    pparams = prepare_params(params)          # padded once, reused every call

    # f32 fused path: tight numerical check vs reference.
    out = jax.block_until_ready(ff_forward(x, pparams))
    ref = ff_reference(x, params)
    assert out.shape == (batch, input_dim)
    assert jnp.allclose(out, ref, atol=1e-4, rtol=1e-4), "f32 fused mismatch"

    # Opt-in bf16 MXU compute from f32 inputs (f32 accumulation/epilogue).
    out_bfc = jax.block_until_ready(
        ff_forward(x, pparams, compute_dtype=jnp.bfloat16))
    assert out_bfc.shape == (batch, input_dim)
    assert jnp.allclose(out_bfc, ref, atol=1.5e-1, rtol=5e-2), "bf16-compute mismatch"

    # Native bf16 inputs/weights fast path.
    xb = x.astype(jnp.bfloat16)
    pb = {k: v.astype(jnp.bfloat16) for k, v in params.items()}
    out_b = jax.block_until_ready(ff_forward(xb, prepare_params(pb)))
    ref_b = ff_reference(xb.astype(jnp.float32),
                         {k: v.astype(jnp.float32) for k, v in pb.items()})
    assert out_b.shape == (batch, input_dim)
    assert jnp.allclose(out_b.astype(jnp.float32), ref_b, atol=1e-1, rtol=5e-2), \
        "bf16 mismatch"

    # Large-D / v7x fallback (K/N-tiled per-layer kernels) exercised at small shape.
    out_t = jax.block_until_ready(ff_forward(x, pparams, force_tiled=True))
    assert out_t.shape == (batch, input_dim)
    assert jnp.allclose(out_t, ref, atol=1e-4, rtol=1e-4), "tiled path mismatch"

    print("KERNEL_OK")
</pallas_src>

<mosaic_0001>
module attributes {stable_mosaic.version = 11 : i64} {
  func.func @ff_fused_kernel(%arg0: i32, %arg1: memref<8x128xf32, #tpu.memory_space<vmem>>, %arg2: memref<128x128xf32, #tpu.memory_space<vmem>>, %arg3: memref<1x128xf32, #tpu.memory_space<vmem>>, %arg4: memref<128x128xf32, #tpu.memory_space<vmem>>, %arg5: memref<1x128xf32, #tpu.memory_space<vmem>>, %arg6: memref<128x128xf32, #tpu.memory_space<vmem>>, %arg7: memref<1x128xf32, #tpu.memory_space<vmem>>, %arg8: memref<128x128xf32, #tpu.memory_space<vmem>>, %arg9: memref<1x128xf32, #tpu.memory_space<vmem>>, %arg10: memref<8x128xf32, #tpu.memory_space<vmem>>) attributes {dimension_semantics = [#tpu.dimension_semantics<parallel>], iteration_bounds = array<i64: 1>, scalar_prefetch = 0 : i64, scratch_operands = 0 : i64, tpu.core_type = #tpu.core_type<tc>, window_params = [{transform_indices = @transform_0, window_bounds = array<i64: 8, 128>}, {pipeline_mode = #tpu.pipeline_mode<synchronous>, transform_indices = @transform_1, window_bounds = array<i64: 128, 128>}, {pipeline_mode = #tpu.pipeline_mode<synchronous>, transform_indices = @transform_2, window_bounds = array<i64: 1, 128>}, {pipeline_mode = #tpu.pipeline_mode<synchronous>, transform_indices = @transform_3, window_bounds = array<i64: 128, 128>}, {pipeline_mode = #tpu.pipeline_mode<synchronous>, transform_indices = @transform_4, window_bounds = array<i64: 1, 128>}, {pipeline_mode = #tpu.pipeline_mode<synchronous>, transform_indices = @transform_5, window_bounds = array<i64: 128, 128>}, {pipeline_mode = #tpu.pipeline_mode<synchronous>, transform_indices = @transform_6, window_bounds = array<i64: 1, 128>}, {pipeline_mode = #tpu.pipeline_mode<synchronous>, transform_indices = @transform_7, window_bounds = array<i64: 128, 128>}, {pipeline_mode = #tpu.pipeline_mode<synchronous>, transform_indices = @transform_8, window_bounds = array<i64: 1, 128>}, {transform_indices = @transform_9, window_bounds = array<i64: 8, 128>}]} {
    %c0 = arith.constant 0 : index
    %c0_0 = arith.constant 0 : index
    %0 = vector.load %arg1[%c0, %c0_0] : memref<8x128xf32, #tpu.memory_space<vmem>>, vector<8x128xf32>
    %c0_1 = arith.constant 0 : index
    %c0_2 = arith.constant 0 : index
    %1 = vector.load %arg2[%c0_1, %c0_2] : memref<128x128xf32, #tpu.memory_space<vmem>>, vector<128x128xf32>
    %cst = arith.constant dense<0.000000e+00> : vector<8x128xf32>
    %2 = tpu.matmul %0, %1, %cst {dimension_numbers = #tpu.dot_dimension_numbers<[1], [0], [0], [1], [0, 0, 1, 1], [], []>} : vector<8x128xf32>, vector<128x128xf32>, vector<8x128xf32> -> vector<8x128xf32>
    %c0_3 = arith.constant 0 : index
    %c0_4 = arith.constant 0 : index
    %3 = vector.load %arg3[%c0_3, %c0_4] : memref<1x128xf32, #tpu.memory_space<vmem>>, vector<1x128xf32>
    %4 = vector.broadcast %3 : vector<1x128xf32> to vector<8x128xf32>
    %5 = arith.addf %2, %4 : vector<8x128xf32>
    %cst_5 = arith.constant 0.000000e+00 : f32
    %6 = vector.broadcast %cst_5 : f32 to vector<8x128xf32>
    %7 = arith.maximumf %5, %6 : vector<8x128xf32>
    %c0_6 = arith.constant 0 : index
    %c0_7 = arith.constant 0 : index
    %8 = vector.load %arg4[%c0_6, %c0_7] : memref<128x128xf32, #tpu.memory_space<vmem>>, vector<128x128xf32>
    %cst_8 = arith.constant dense<0.000000e+00> : vector<8x128xf32>
    %9 = tpu.matmul %7, %8, %cst_8 {dimension_numbers = #tpu.dot_dimension_numbers<[1], [0], [0], [1], [0, 0, 1, 1], [], []>} : vector<8x128xf32>, vector<128x128xf32>, vector<8x128xf32> -> vector<8x128xf32>
    %c0_9 = arith.constant 0 : index
    %c0_10 = arith.constant 0 : index
    %10 = vector.load %arg5[%c0_9, %c0_10] : memref<1x128xf32, #tpu.memory_space<vmem>>, vector<1x128xf32>
    %11 = vector.broadcast %10 : vector<1x128xf32> to vector<8x128xf32>
    %12 = arith.addf %9, %11 : vector<8x128xf32>
    %cst_11 = arith.constant 0.000000e+00 : f32
    %13 = vector.broadcast %cst_11 : f32 to vector<8x128xf32>
    %14 = arith.maximumf %12, %13 : vector<8x128xf32>
    %c0_12 = arith.constant 0 : index
    %c0_13 = arith.constant 0 : index
    %15 = vector.load %arg6[%c0_12, %c0_13] : memref<128x128xf32, #tpu.memory_space<vmem>>, vector<128x128xf32>
    %cst_14 = arith.constant dense<0.000000e+00> : vector<8x128xf32>
    %16 = tpu.matmul %14, %15, %cst_14 {dimension_numbers = #tpu.dot_dimension_numbers<[1], [0], [0], [1], [0, 0, 1, 1], [], []>} : vector<8x128xf32>, vector<128x128xf32>, vector<8x128xf32> -> vector<8x128xf32>
    %c0_15 = arith.constant 0 : index
    %c0_16 = arith.constant 0 : index
    %17 = vector.load %arg7[%c0_15, %c0_16] : memref<1x128xf32, #tpu.memory_space<vmem>>, vector<1x128xf32>
    %18 = vector.broadcast %17 : vector<1x128xf32> to vector<8x128xf32>
    %19 = arith.addf %16, %18 : vector<8x128xf32>
    %cst_17 = arith.constant 0.000000e+00 : f32
    %20 = vector.broadcast %cst_17 : f32 to vector<8x128xf32>
    %21 = arith.maximumf %19, %20 : vector<8x128xf32>
    %c0_18 = arith.constant 0 : index
    %c0_19 = arith.constant 0 : index
    %22 = vector.load %arg8[%c0_18, %c0_19] : memref<128x128xf32, #tpu.memory_space<vmem>>, vector<128x128xf32>
    %cst_20 = arith.constant dense<0.000000e+00> : vector<8x128xf32>
    %23 = tpu.matmul %0, %22, %cst_20 {dimension_numbers = #tpu.dot_dimension_numbers<[1], [0], [0], [1], [0, 0, 1, 1], [], []>} : vector<8x128xf32>, vector<128x128xf32>, vector<8x128xf32> -> vector<8x128xf32>
    %c0_21 = arith.constant 0 : index
    %c0_22 = arith.constant 0 : index
    %24 = vector.load %arg9[%c0_21, %c0_22] : memref<1x128xf32, #tpu.memory_space<vmem>>, vector<1x128xf32>
    %25 = vector.broadcast %24 : vector<1x128xf32> to vector<8x128xf32>
    %26 = arith.addf %23, %25 : vector<8x128xf32>
    %27 = arith.addf %21, %26 : vector<8x128xf32>
    %c0_23 = arith.constant 0 : index
    %c0_24 = arith.constant 0 : index
    %28 = vector.load %arg10[%c0_23, %c0_24] : memref<8x128xf32, #tpu.memory_space<vmem>>, vector<8x128xf32>
    tpu.vector_store %arg10[%c0_23, %c0_24], %27 {strides = array<i32>} : memref<8x128xf32, #tpu.memory_space<vmem>>, vector<8x128xf32>,
    return
  }
  func.func @transform_0(%arg0: i32) -> (i32, i32) {
    %c0_i32 = arith.constant 0 : i32
    %c0_i32_0 = arith.constant 0 : i32
    return %arg0, %c0_i32 : i32, i32
  }
  func.func @transform_1(%arg0: i32) -> (i32, i32) {
    %c0_i32 = arith.constant 0 : i32
    %c0_i32_0 = arith.constant 0 : i32
    %c0_i32_1 = arith.constant 0 : i32
    return %c0_i32, %c0_i32_0 : i32, i32
  }
  func.func @transform_2(%arg0: i32) -> (i32, i32) {
    %c0_i32 = arith.constant 0 : i32
    %c0_i32_0 = arith.constant 0 : i32
    %c0_i32_1 = arith.constant 0 : i32
    return %c0_i32, %c0_i32_0 : i32, i32
  }
  func.func @transform_3(%arg0: i32) -> (i32, i32) {
    %c0_i32 = arith.constant 0 : i32
    %c0_i32_0 = arith.constant 0 : i32
    %c0_i32_1 = arith.constant 0 : i32
    return %c0_i32, %c0_i32_0 : i32, i32
  }
  func.func @transform_4(%arg0: i32) -> (i32, i32) {
    %c0_i32 = arith.constant 0 : i32
    %c0_i32_0 = arith.constant 0 : i32
    %c0_i32_1 = arith.constant 0 : i32
    return %c0_i32, %c0_i32_0 : i32, i32
  }
  func.func @transform_5(%arg0: i32) -> (i32, i32) {
    %c0_i32 = arith.constant 0 : i32
    %c0_i32_0 = arith.constant 0 : i32
    %c0_i32_1 = arith.constant 0 : i32
    return %c0_i32, %c0_i32_0 : i32, i32
  }
  func.func @transform_6(%arg0: i32) -> (i32, i32) {
    %c0_i32 = arith.constant 0 : i32
    %c0_i32_0 = arith.constant 0 : i32
    %c0_i32_1 = arith.constant 0 : i32
    return %c0_i32, %c0_i32_0 : i32, i32
  }
  func.func @transform_7(%arg0: i32) -> (i32, i32) {
    %c0_i32 = arith.constant 0 : i32
    %c0_i32_0 = arith.constant 0 : i32
    %c0_i32_1 = arith.constant 0 : i32
    return %c0_i32, %c0_i32_0 : i32, i32
  }
  func.func @transform_8(%arg0: i32) -> (i32, i32) {
    %c0_i32 = arith.constant 0 : i32
    %c0_i32_0 = arith.constant 0 : i32
    %c0_i32_1 = arith.constant 0 : i32
    return %c0_i32, %c0_i32_0 : i32, i32
  }
  func.func @transform_9(%arg0: i32) -> (i32, i32) {
    %c0_i32 = arith.constant 0 : i32
    %c0_i32_0 = arith.constant 0 : i32
    return %arg0, %c0_i32 : i32, i32
  }
}

</mosaic_0001>

<llo_original>
// kernel: ff_forward.1
$region0: #{ff_forward.1}
  #allocation0 [shape = 'u32[]', space=smem, size = 0x4, offset = 0x4, fixed_abs, tag = 'smem constant byte address 0x4 - core index']
  #allocation1 [shape = 'u32[72,128]{1,0:T(1,128)}', space=vmem, size = 0x9000, scoped, tag = 'internal scratch']
  %s0 = inlined_call_operand.vmem [shape: f32[8,128], index: 0, kind: input, shape index: {}]
  %s1 = inlined_call_operand.hbm [shape: f32[128,128], index: 1, kind: input, shape index: {}]
  %s2 = inlined_call_operand.vmem [shape: f32[1,128], index: 2, kind: input, shape index: {}]
  %s3 = inlined_call_operand.hbm [shape: f32[128,128], index: 3, kind: input, shape index: {}]
  %s4 = inlined_call_operand.vmem [shape: f32[1,128], index: 4, kind: input, shape index: {}]
  %s5 = inlined_call_operand.hbm [shape: f32[128,128], index: 5, kind: input, shape index: {}]
  %s6 = inlined_call_operand.vmem [shape: f32[1,128], index: 6, kind: input, shape index: {}]
  %s7 = inlined_call_operand.hbm [shape: f32[128,128], index: 7, kind: input, shape index: {}]
  %s8 = inlined_call_operand.vmem [shape: f32[1,128], index: 8, kind: input, shape index: {}]
  %s9 = inlined_call_operand.hbm [shape: f32[8,128], index: 9, kind: output, shape index: {}]
  %s10 = sld [smem:[#allocation0]]
  $region62: #{ff_forward.1} parent=0
    _
  %s12 = ssub.s32 1, %s10
  %s13 = scalar_select 0, %s12, %s10
  $region1: #{ff_forward.1} parent=0
    #allocation2 [shape = 'u8[65536]{0}', space=vmem, size = 0x10000, scoped, tag = 'input window, operand 1, single buffered']
    #allocation3 [shape = 's32[1]{0}', space=sflag, size = 0x4, scoped, tag = 'scoped memory for ff_forward.1']
    #allocation4 [shape = 's32[1]{0}', space=sflag, size = 0x4, scoped, tag = 'scoped memory for ff_forward.1']
    #allocation5 [shape = 'u8[65536]{0}', space=vmem, size = 0x10000, scoped, tag = 'input window, operand 3, single buffered']
    #allocation6 [shape = 's32[1]{0}', space=sflag, size = 0x4, scoped, tag = 'scoped memory for ff_forward.1']
    #allocation7 [shape = 'u8[65536]{0}', space=vmem, size = 0x10000, scoped, tag = 'input window, operand 5, single buffered']
    #allocation8 [shape = 'u8[65536]{0}', space=vmem, size = 0x10000, scoped, tag = 'input window, operand 7, single buffered']
    #allocation9 [shape = 's32[1]{0}', space=sflag, size = 0x4, scoped, tag = 'scoped memory for ff_forward.1']
    #allocation10 [shape = 'u8[4096]{0}', space=vmem, size = 0x1000, scoped, tag = 'output window, operand 0, single buffered']
    %14 = vsyncpa [#allocation3], 0
    %15 = vsyncpa [#allocation6], 0
    %16 = vsyncpa [#allocation9], 0
    %17 = vsyncpa [#allocation4], 0
    // Predicated region
    $region2: #{ff_forward.1} parent=1 // pred_check
      _
    $region3: #{ff_forward.1} parent=1 // pred_check_branch
      %19 = sbr.rel (0) target = $region5
    $region4: #{ff_forward.1} parent=1 // pred_region
      _
    $region5: #{ff_forward.1} parent=1 // pred_fallthru
      _
    // Predicated region
    $region6: #{ff_forward.1} parent=1 // pred_check
      _
    $region7: #{ff_forward.1} parent=1 // pred_check_branch
      %21 = sbr.rel (0) target = $region9
    $region8: #{ff_forward.1} parent=1 // pred_region
      %23 = vsyncadd [#allocation3], 0
      %s24 = sshll.u32 %s1, 4
      %s25 = int_to_ptr.hbm [resolvable:$true] %s24
      %s26 = sshll.u32 [#allocation2], 4
      %s27 = int_to_ptr.vmem [resolvable:$true] %s26
      %32 = dma.hbm_to_vmem [thread:$0]  %s25, 2048, %s27, [#allocation3], 128, 128, 8
    $region9: #{ff_forward.1} parent=1 // pred_fallthru
      _
    // Predicated region
    $region10: #{ff_forward.1} parent=1 // pred_check
      _
    $region11: #{ff_forward.1} parent=1 // pred_check_branch
      %34 = sbr.rel (0) target = $region13
    $region12: #{ff_forward.1} parent=1 // pred_region
      _
    $region13: #{ff_forward.1} parent=1 // pred_fallthru
      _
    // Predicated region
    $region14: #{ff_forward.1} parent=1 // pred_check
      _
    $region15: #{ff_forward.1} parent=1 // pred_check_branch
      %36 = sbr.rel (0) target = $region17
    $region16: #{ff_forward.1} parent=1 // pred_region
      %38 = vsyncadd [#allocation6], 0
      %s39 = sshll.u32 %s3, 4
      %s40 = int_to_ptr.hbm [resolvable:$true] %s39
      %s41 = sshll.u32 [#allocation5], 4
      %s42 = int_to_ptr.vmem [resolvable:$true] %s41
      %47 = dma.hbm_to_vmem [thread:$0]  %s40, 2048, %s42, [#allocation6], 128, 128, 8
    $region17: #{ff_forward.1} parent=1 // pred_fallthru
      _
    // Predicated region
    $region18: #{ff_forward.1} parent=1 // pred_check
      _
    $region19: #{ff_forward.1} parent=1 // pred_check_branch
      %49 = sbr.rel (0) target = $region21
    $region20: #{ff_forward.1} parent=1 // pred_region
      _
    $region21: #{ff_forward.1} parent=1 // pred_fallthru
      _
    // Predicated region
    $region22: #{ff_forward.1} parent=1 // pred_check
      _
    $region23: #{ff_forward.1} parent=1 // pred_check_branch
      %51 = sbr.rel (0) target = $region25
    $region24: #{ff_forward.1} parent=1 // pred_region
      %53 = vsyncadd [#allocation6], 0
      %s54 = sshll.u32 %s5, 4
      %s55 = int_to_ptr.hbm [resolvable:$true] %s54
      %s56 = sshll.u32 [#allocation7], 4
      %s57 = int_to_ptr.vmem [resolvable:$true] %s56
      %62 = dma.hbm_to_vmem [thread:$0]  %s55, 2048, %s57, [#allocation6], 128, 128, 8
    $region25: #{ff_forward.1} parent=1 // pred_fallthru
      _
    // Predicated region
    $region26: #{ff_forward.1} parent=1 // pred_check
      _
    $region27: #{ff_forward.1} parent=1 // pred_check_branch
      %64 = sbr.rel (0) target = $region29
    $region28: #{ff_forward.1} parent=1 // pred_region
      _
    $region29: #{ff_forward.1} parent=1 // pred_fallthru
      _
    // Predicated region
    $region30: #{ff_forward.1} parent=1 // pred_check
      _
    $region31: #{ff_forward.1} parent=1 // pred_check_branch
      %66 = sbr.rel (0) target = $region33
    $region32: #{ff_forward.1} parent=1 // pred_region
      %68 = vsyncadd [#allocation9], 0
      %s69 = sshll.u32 %s7, 4
      %s70 = int_to_ptr.hbm [resolvable:$true] %s69
      %s71 = sshll.u32 [#allocation8], 4
      %s72 = int_to_ptr.vmem [resolvable:$true] %s71
      %77 = dma.hbm_to_vmem [thread:$0]  %s70, 2048, %s72, [#allocation9], 128, 128, 8
    $region33: #{ff_forward.1} parent=1 // pred_fallthru
      _
    // Predicated region
    $region34: #{ff_forward.1} parent=1 // pred_check
      _
    $region35: #{ff_forward.1} parent=1 // pred_check_branch
      %79 = sbr.rel (0) target = $region37
    $region36: #{ff_forward.1} parent=1 // pred_region
      _
    $region37: #{ff_forward.1} parent=1 // pred_fallthru
      _
    // Predicated region
    $region38: #{ff_forward.1} parent=1 // pred_check
      _
    $region39: #{ff_forward.1} parent=1 // pred_check_branch
      %81 = sbr.rel (0) target = $region41
    $region40: #{ff_forward.1} parent=1 // pred_region
      %83 = dma.done [#allocation3], 2048
    $region41: #{ff_forward.1} parent=1 // pred_fallthru
      _
    // Predicated region
    $region42: #{ff_forward.1} parent=1 // pred_check
      _
    $region43: #{ff_forward.1} parent=1 // pred_check_branch
      %85 = sbr.rel (0) target = $region45
    $region44: #{ff_forward.1} parent=1 // pred_region
      %87 = dma.done [#allocation6], 2048
    $region45: #{ff_forward.1} parent=1 // pred_fallthru
      _
    // Predicated region
    $region46: #{ff_forward.1} parent=1 // pred_check
      _
    $region47: #{ff_forward.1} parent=1 // pred_check_branch
      %89 = sbr.rel (0) target = $region49
    $region48: #{ff_forward.1} parent=1 // pred_region
      %91 = dma.done [#allocation6], 2048
    $region49: #{ff_forward.1} parent=1 // pred_fallthru
      _
    // Predicated region
    $region50: #{ff_forward.1} parent=1 // pred_check
      _
    $region51: #{ff_forward.1} parent=1 // pred_check_branch
      %93 = sbr.rel (0) target = $region53
    $region52: #{ff_forward.1} parent=1 // pred_region
      %95 = dma.done [#allocation9], 2048
    $region53: #{ff_forward.1} parent=1 // pred_fallthru
      _
    %v96 = vld [vmem:[%s0] sm:$0xff]
    %v97 = vld [vmem:[#allocation2] sm:$0xff]
    %v98 = vld [vmem:[#allocation2 + $0x8] sm:$0xff]
    %v99 = vld [vmem:[#allocation2 + $0x10] sm:$0xff]
    %v100 = vld [vmem:[#allocation2 + $0x18] sm:$0xff]
    %v101 = vld [vmem:[#allocation2 + $0x20] sm:$0xff]
    %v102 = vld [vmem:[#allocation2 + $0x28] sm:$0xff]
    %v103 = vld [vmem:[#allocation2 + $0x30] sm:$0xff]
    %v104 = vld [vmem:[#allocation2 + $0x38] sm:$0xff]
    %v105 = vld [vmem:[#allocation2 + $0x40] sm:$0xff]
    %v106 = vld [vmem:[#allocation2 + $0x48] sm:$0xff]
    %v107 = vld [vmem:[#allocation2 + $0x50] sm:$0xff]
    %v108 = vld [vmem:[#allocation2 + $0x58] sm:$0xff]
    %v109 = vld [vmem:[#allocation2 + $0x60] sm:$0xff]
    %v110 = vld [vmem:[#allocation2 + $0x68] sm:$0xff]
    %v111 = vld [vmem:[#allocation2 + $0x70] sm:$0xff]
    %v112 = vld [vmem:[#allocation2 + $0x78] sm:$0xff]
    %v113 = vld [vmem:[%s2] sm:$0x1]
    %v115 = vperm.slane %v113, 0
    %117 = vmatpush.msra.mxu0 %v112
    %118 = vmatpush.msra.mxu0 %v111
    %119 = vmatpush.msra.mxu0 %v110
    %120 = vmatpush.msra.mxu0 %v109
    %121 = vmatpush.msra.mxu0 %v108
    %122 = vmatpush.msra.mxu0 %v107
    %123 = vmatpush.msra.mxu0 %v106
    %124 = vmatpush.msra.mxu0 %v105
    %125 = vmatpush.msra.mxu0 %v104
    %126 = vmatpush.msra.mxu0 %v103
    %127 = vmatpush.msra.mxu0 %v102
    %128 = vmatpush.msra.mxu0 %v101
    %129 = vmatpush.msra.mxu0 %v100
    %130 = vmatpush.msra.mxu0 %v99
    %131 = vmatpush.msra.mxu0 %v98
    %132 = vmatpush.msra.mxu0 %v97
    %133 = vmatmul.f32.gmra.mxu0 %v96
    %v134 = vpop.f32.mrf.mxu0
    %v135 = vadd.f32 %v115, %v134
    %136 = vdwg.mxu0
    %v137 = vmax.f32 %v135, 0.0
    %v138 = vld [vmem:[#allocation5] sm:$0xff]
    %v139 = vld [vmem:[#allocation5 + $0x8] sm:$0xff]
    %v140 = vld [vmem:[#allocation5 + $0x10] sm:$0xff]
    %v141 = vld [vmem:[#allocation5 + $0x18] sm:$0xff]
    %v142 = vld [vmem:[#allocation5 + $0x20] sm:$0xff]
    %v143 = vld [vmem:[#allocation5 + $0x28] sm:$0xff]
    %v144 = vld [vmem:[#allocation5 + $0x30] sm:$0xff]
    %v145 = vld [vmem:[#allocation5 + $0x38] sm:$0xff]
    %v146 = vld [vmem:[#allocation5 + $0x40] sm:$0xff]
    %v147 = vld [vmem:[#allocation5 + $0x48] sm:$0xff]
    %v148 = vld [vmem:[#allocation5 + $0x50] sm:$0xff]
    %v149 = vld [vmem:[#allocation5 + $0x58] sm:$0xff]
    %v150 = vld [vmem:[#allocation5 + $0x60] sm:$0xff]
    %v151 = vld [vmem:[#allocation5 + $0x68] sm:$0xff]
    %v152 = vld [vmem:[#allocation5 + $0x70] sm:$0xff]
    %v153 = vld [vmem:[#allocation5 + $0x78] sm:$0xff]
    %v154 = vld [vmem:[%s4] sm:$0x1]
    %v156 = vperm.slane %v154, 0
    %158 = vmatpush.msra.mxu0 %v153
    %159 = vmatpush.msra.mxu0 %v152
    %160 = vmatpush.msra.mxu0 %v151
    %161 = vmatpush.msra.mxu0 %v150
    %162 = vmatpush.msra.mxu0 %v149
    %163 = vmatpush.msra.mxu0 %v148
    %164 = vmatpush.msra.mxu0 %v147
    %165 = vmatpush.msra.mxu0 %v146
    %166 = vmatpush.msra.mxu0 %v145
    %167 = vmatpush.msra.mxu0 %v144
    %168 = vmatpush.msra.mxu0 %v143
    %169 = vmatpush.msra.mxu0 %v142
    %170 = vmatpush.msra.mxu0 %v141
    %171 = vmatpush.msra.mxu0 %v140
    %172 = vmatpush.msra.mxu0 %v139
    %173 = vmatpush.msra.mxu0 %v138
    %174 = vmatmul.f32.gmra.mxu0 %v137
    %v175 = vpop.f32.mrf.mxu0
    %v176 = vadd.f32 %v156, %v175
    %177 = vdwg.mxu0
    %v178 = vmax.f32 %v176, 0.0
    %v179 = vld [vmem:[#allocation7] sm:$0xff]
    %v180 = vld [vmem:[#allocation7 + $0x8] sm:$0xff]
    %v181 = vld [vmem:[#allocation7 + $0x10] sm:$0xff]
    %v182 = vld [vmem:[#allocation7 + $0x18] sm:$0xff]
    %v183 = vld [vmem:[#allocation7 + $0x20] sm:$0xff]
    %v184 = vld [vmem:[#allocation7 + $0x28] sm:$0xff]
    %v185 = vld [vmem:[#allocation7 + $0x30] sm:$0xff]
    %v186 = vld [vmem:[#allocation7 + $0x38] sm:$0xff]
    %v187 = vld [vmem:[#allocation7 + $0x40] sm:$0xff]
    %v188 = vld [vmem:[#allocation7 + $0x48] sm:$0xff]
    %v189 = vld [vmem:[#allocation7 + $0x50] sm:$0xff]
    %v190 = vld [vmem:[#allocation7 + $0x58] sm:$0xff]
    %v191 = vld [vmem:[#allocation7 + $0x60] sm:$0xff]
    %v192 = vld [vmem:[#allocation7 + $0x68] sm:$0xff]
    %v193 = vld [vmem:[#allocation7 + $0x70] sm:$0xff]
    %v194 = vld [vmem:[#allocation7 + $0x78] sm:$0xff]
    %v195 = vld [vmem:[%s6] sm:$0x1]
    %v197 = vperm.slane %v195, 0
    %199 = vmatpush.msra.mxu0 %v194
    %200 = vmatpush.msra.mxu0 %v193
    %201 = vmatpush.msra.mxu0 %v192
    %202 = vmatpush.msra.mxu0 %v191
    %203 = vmatpush.msra.mxu0 %v190
    %204 = vmatpush.msra.mxu0 %v189
    %205 = vmatpush.msra.mxu0 %v188
    %206 = vmatpush.msra.mxu0 %v187
    %207 = vmatpush.msra.mxu0 %v186
    %208 = vmatpush.msra.mxu0 %v185
    %209 = vmatpush.msra.mxu0 %v184
    %210 = vmatpush.msra.mxu0 %v183
    %211 = vmatpush.msra.mxu0 %v182
    %212 = vmatpush.msra.mxu0 %v181
    %213 = vmatpush.msra.mxu0 %v180
    %214 = vmatpush.msra.mxu0 %v179
    %215 = vmatmul.f32.gmra.mxu0 %v178
    %v216 = vpop.f32.mrf.mxu0
    %v217 = vadd.f32 %v197, %v216
    %218 = vdwg.mxu0
    %v219 = vmax.f32 %v217, 0.0
    %v220 = vld [vmem:[#allocation8] sm:$0xff]
    %v221 = vld [vmem:[#allocation8 + $0x8] sm:$0xff]
    %v222 = vld [vmem:[#allocation8 + $0x10] sm:$0xff]
    %v223 = vld [vmem:[#allocation8 + $0x18] sm:$0xff]
    %v224 = vld [vmem:[#allocation8 + $0x20] sm:$0xff]
    %v225 = vld [vmem:[#allocation8 + $0x28] sm:$0xff]
    %v226 = vld [vmem:[#allocation8 + $0x30] sm:$0xff]
    %v227 = vld [vmem:[#allocation8 + $0x38] sm:$0xff]
    %v228 = vld [vmem:[#allocation8 + $0x40] sm:$0xff]
    %v229 = vld [vmem:[#allocation8 + $0x48] sm:$0xff]
    %v230 = vld [vmem:[#allocation8 + $0x50] sm:$0xff]
    %v231 = vld [vmem:[#allocation8 + $0x58] sm:$0xff]
    %v232 = vld [vmem:[#allocation8 + $0x60] sm:$0xff]
    %v233 = vld [vmem:[#allocation8 + $0x68] sm:$0xff]
    %v234 = vld [vmem:[#allocation8 + $0x70] sm:$0xff]
    %v235 = vld [vmem:[#allocation8 + $0x78] sm:$0xff]
    %v236 = vld [vmem:[%s8] sm:$0x1]
    %v238 = vperm.slane %v236, 0
    %240 = vmatpush.msra.mxu0 %v235
    %241 = vmatpush.msra.mxu0 %v234
    %242 = vmatpush.msra.mxu0 %v233
    %243 = vmatpush.msra.mxu0 %v232
    %244 = vmatpush.msra.mxu0 %v231
    %245 = vmatpush.msra.mxu0 %v230
    %246 = vmatpush.msra.mxu0 %v229
    %247 = vmatpush.msra.mxu0 %v228
    %248 = vmatpush.msra.mxu0 %v227
    %249 = vmatpush.msra.mxu0 %v226
    %250 = vmatpush.msra.mxu0 %v225
    %251 = vmatpush.msra.mxu0 %v224
    %252 = vmatpush.msra.mxu0 %v223
    %253 = vmatpush.msra.mxu0 %v222
    %254 = vmatpush.msra.mxu0 %v221
    %255 = vmatpush.msra.mxu0 %v220
    %256 = vmatmul.f32.gmra.mxu0 %v96
    %v257 = vpop.f32.mrf.mxu0
    %v258 = vadd.f32 %v238, %v257
    %259 = vdwg.mxu0
    %v260 = vadd.f32 %v219, %v258
    %261 = vst [vmem:[#allocation10] sm:$0xff] %v260
    // Predicated region
    $region54: #{ff_forward.1} parent=1 // pred_check
      _
    $region55: #{ff_forward.1} parent=1 // pred_check_branch
      %263 = sbr.rel (0) target = $region57
    $region56: #{ff_forward.1} parent=1 // pred_region
      %265 = vsyncadd [#allocation4], 0
      %s267 = sshll.u32 [#allocation10], 4
      %s268 = int_to_ptr.vmem [resolvable:$true] %s267
      %s269 = sshll.u32 %s9, 4
      %s270 = int_to_ptr.hbm [resolvable:$true] %s269
      %272 = dma.vmem_to_hbm [thread:$0]  %s268, 128, %s270, [#allocation4]
    $region57: #{ff_forward.1} parent=1 // pred_fallthru
      _
    // Predicated region
    $region58: #{ff_forward.1} parent=1 // pred_check
      _
    $region59: #{ff_forward.1} parent=1 // pred_check_branch
      %274 = sbr.rel (0) target = $region61
    $region60: #{ff_forward.1} parent=1 // pred_region
      %276 = dma.done [#allocation4], 128
    $region61: #{ff_forward.1} parent=1 // pred_fallthru
      _
    %277 = vsyncpa [#allocation3], 1
    %278 = vsyncpa [#allocation6], 1
    %279 = vsyncpa [#allocation9], 1
    %280 = vsyncpa [#allocation4], 1

</llo_original>
